<compile_context>
chip_gen: v5e
topology: v5e:2x2
jax: 0.10.0
libtpu: 0.0.40
codegen_flags: <defaults>
</compile_context>

<pallas_src>
import jax
import jax.numpy as jnp
from jax.experimental import pallas as pl
from jax.experimental.pallas import tpu as pltpu

_LANE = 128
_SUB = 8
_FIELDS = 11                      # 2 class logits + 4 box preds + 1 label + 4 reg targets
_SLAB_ROWS = _FIELDS * _SUB       # 88: every field owns 8 sublanes (full VPU occupancy)
_ANCHOR_ALIGN = _SUB * _LANE      # 1024 anchors -> one (8, 128) tile per field
_MAX_BLOCK_ANCHORS = 128 * 1024   # 16384 lanes/block: 88*16384*4B = 5.5 MiB per buffer


def _cdiv(a, b):
    return (a + b - 1) // b


def _round_up(a, b):
    return _cdiv(a, b) * b


def _multibox_loss_kernel(slab_ref, out_ref):
    # Row map (each field occupies 8 consecutive sublanes):
    #   [ 0, 8)  logit class 0        [ 8,16)  logit class 1
    #   [16,48)  box predictions      [48,56)  class label
    #   [56,88)  regression targets
    x0 = slab_ref[0:8, :].astype(jnp.float32)      # [8, BC]
    x1 = slab_ref[8:16, :].astype(jnp.float32)     # [8, BC]
    label = slab_ref[48:56, :].astype(jnp.float32)

    pos = label == 1.0
    valid = jnp.logical_or(label == 0.0, pos)      # padded anchors carry label -1

    # ---- classification: 2-class CE == softplus(other - target), stable form ----
    z = jnp.where(pos, x0 - x1, x1 - x0)
    ce = jnp.maximum(z, 0.0) + jnp.log1p(jnp.exp(-jnp.abs(z)))
    ce = jnp.where(valid, ce, 0.0)
    closs_p = jnp.sum(ce)                          # unscaled partial sum

    # ---- regression: smooth L1 over 4 box dims, positives only ----
    reg_acc = jnp.zeros_like(x0)
    for j in range(4):
        d = (slab_ref[16 + 8 * j:24 + 8 * j, :].astype(jnp.float32)
             - slab_ref[56 + 8 * j:64 + 8 * j, :].astype(jnp.float32))
        ad = jnp.abs(d)
        reg_acc = reg_acc + jnp.where(ad < 1.0, 0.5 * d * d, ad - 0.5)
    reg_acc = jnp.where(pos, reg_acc, 0.0)
    rloss_p = jnp.sum(reg_acc)                     # unscaled partial sum

    # Per-block partials: sublane 0 carries closs, sublane 1 carries rloss
    # (the wrapper reads lane 0 of each).  Distinct output block per grid step.
    sub = jax.lax.broadcasted_iota(jnp.int32, (1, _SUB, _LANE), 1)
    out_ref[...] = (jnp.where(sub == 0, closs_p, 0.0)
                    + jnp.where(sub == 1, rloss_p, 0.0))


def multibox_loss(predictions, targets, mask_target=None,
                  max_block_anchors=_MAX_BLOCK_ANCHORS):
    """predictions = (cout [N,2], rout [N,4], mask); targets [N,5] (col 0 = label)."""
    cout, rout, _mask = predictions
    n = cout.shape[0]

    slab_dtype = jnp.result_type(cout.dtype, rout.dtype, targets.dtype)
    if not jnp.issubdtype(slab_dtype, jnp.floating):
        slab_dtype = jnp.float32          # label equality checks rely on float compares

    # Block sizing: compute the block count first, then split evenly, so padding
    # waste is bounded by < _ANCHOR_ALIGN anchors per block.
    max_block_anchors = max(_round_up(max_block_anchors, _ANCHOR_ALIGN), _ANCHOR_ALIGN)
    n_align = _round_up(n, _ANCHOR_ALIGN)
    num_blocks = _cdiv(n_align, max_block_anchors)
    block_anchors = _round_up(_cdiv(n_align, num_blocks), _ANCHOR_ALIGN)
    n_pad = num_blocks * block_anchors
    block_cols = block_anchors // _SUB
    n_cols = n_pad // _SUB

    # One concat + one pad + one transpose/reshape.  Padded anchors are filled
    # with -1 everywhere, so their label (-1) excludes them from both losses.
    fields = jnp.concatenate(
        [cout.astype(slab_dtype), rout.astype(slab_dtype), targets.astype(slab_dtype)],
        axis=1)                                                    # [N, 11]
    fields = jnp.pad(fields, ((0, n_pad - n), (0, 0)), constant_values=-1)
    slab = fields.T.reshape(_SLAB_ROWS, n_cols)                    # [88, n_pad/8]

    out = pl.pallas_call(
        _multibox_loss_kernel,
        out_shape=jax.ShapeDtypeStruct((num_blocks, _SUB, _LANE), jnp.float32),
        grid_spec=pltpu.PrefetchScalarGridSpec(
            num_scalar_prefetch=0,
            grid=(num_blocks,),
            in_specs=[pl.BlockSpec((_SLAB_ROWS, block_cols), lambda i: (0, i))],
            out_specs=pl.BlockSpec((1, _SUB, _LANE), lambda i: (i, 0, 0)),
        ),
        compiler_params=pltpu.CompilerParams(
            dimension_semantics=("parallel",),
            vmem_limit_bytes=32 * 1024 * 1024),
    )(slab)

    # Combined constant scalings applied once on the reduced scalars.
    closs = jnp.sum(out[:, 0, 0]) / 64.0
    rloss = jnp.sum(out[:, 1, 0]) / 64.0     # /4 (box dims) then /16 (positives)
    mloss = jnp.float32(0.0)                 # reference module: mloss is always 0
    loss = closs + rloss                     # + 32 * mloss == + 0

    reg_pred = rout
    reg_target = targets[:, 1:]
    # TODO(synk): dynamic-length pos_index / neg_index Python lists (and the 17x17
    # unravel_index dedup loop, which only feeds mloss == 0) have no static-shape
    # equivalent; boolean masks are returned instead.
    pos_mask = targets[:, 0] == 1.0
    neg_mask = targets[:, 0] == 0.0
    return closs, rloss, mloss, loss, reg_pred, reg_target, pos_mask, neg_mask


def _reference(cout, rout, targets):
    """Pure-JAX reference for correctness checking."""
    label = targets[:, 0]
    valid = jnp.logical_or(label == 0.0, label == 1.0)
    pos = label == 1.0
    logp = jax.nn.log_softmax(cout.astype(jnp.float32), axis=-1)
    tgt_lp = jnp.where(pos, logp[:, 1], logp[:, 0])
    closs = jnp.sum(jnp.where(valid, -tgt_lp, 0.0)) / 64.0
    d = rout.astype(jnp.float32) - targets[:, 1:].astype(jnp.float32)
    ad = jnp.abs(d)
    sl1 = jnp.where(ad < 1.0, 0.5 * d * d, ad - 0.5)
    per_row = jnp.sum(sl1, axis=1) / 4.0
    rloss = jnp.sum(jnp.where(pos, per_row, 0.0)) / 16.0
    return closs, rloss, closs + rloss


if __name__ == "__main__":
    # SiamRPN-style anchor count: 17 x 17 spatial positions x 5 anchors.
    N = 17 * 17 * 5
    key = jax.random.PRNGKey(0)
    k1, k2, k3, k4 = jax.random.split(key, 4)

    cout = jax.random.normal(k1, (N, 2), dtype=jnp.float32)
    rout = jax.random.normal(k2, (N, 4), dtype=jnp.float32)
    labels = jax.random.choice(
        k3, jnp.array([-1.0, 0.0, 1.0], dtype=jnp.float32), (N, 1))
    reg_t = jax.random.normal(k4, (N, 4), dtype=jnp.float32)
    targets = jnp.concatenate([labels, reg_t], axis=1)   # [N, 5]

    ref_c, ref_r, ref_l = _reference(cout, rout, targets)

    # Default (single-block) path.
    out = multibox_loss((cout, rout, None), targets, mask_target=None)
    out = jax.block_until_ready(out)
    closs, rloss, loss = out[0], out[1], out[3]
    assert jnp.allclose(closs, ref_c, rtol=1e-5, atol=1e-5), (closs, ref_c)
    assert jnp.allclose(rloss, ref_r, rtol=1e-5, atol=1e-5), (rloss, ref_r)
    assert jnp.allclose(loss, ref_l, rtol=1e-5, atol=1e-5), (loss, ref_l)

    # Forced multi-block path: exercises >1 grid step, per-block partial sums,
    # and tail padding with label = -1.
    out_mb = multibox_loss((cout, rout, None), targets, mask_target=None,
                           max_block_anchors=1024)
    out_mb = jax.block_until_ready(out_mb)
    assert jnp.allclose(out_mb[0], ref_c, rtol=1e-5, atol=1e-5), (out_mb[0], ref_c)
    assert jnp.allclose(out_mb[1], ref_r, rtol=1e-5, atol=1e-5), (out_mb[1], ref_r)
    assert jnp.allclose(out_mb[3], ref_l, rtol=1e-5, atol=1e-5), (out_mb[3], ref_l)

    print("KERNEL_OK")
</pallas_src>

<mosaic_0001>
module attributes {stable_mosaic.version = 11 : i64} {
  func.func @_multibox_loss_kernel(%arg0: i32, %arg1: memref<88x256xf32, #tpu.memory_space<vmem>>, %arg2: memref<1x8x128xf32, #tpu.memory_space<vmem>>) attributes {dimension_semantics = [#tpu.dimension_semantics<parallel>], iteration_bounds = array<i64: 1>, scalar_prefetch = 0 : i64, scratch_operands = 0 : i64, tpu.core_type = #tpu.core_type<tc>, window_params = [{transform_indices = @transform_0, window_bounds = array<i64: 88, 256>}, {transform_indices = @transform_1, window_bounds = array<i64: 1, 8, 128>}]} {
    %c0 = arith.constant 0 : index
    %c0_0 = arith.constant 0 : index
    %0 = vector.load %arg1[%c0, %c0_0] : memref<88x256xf32, #tpu.memory_space<vmem>>, vector<8x256xf32>
    %c8 = arith.constant 8 : index
    %c0_1 = arith.constant 0 : index
    %1 = vector.load %arg1[%c8, %c0_1] : memref<88x256xf32, #tpu.memory_space<vmem>>, vector<8x256xf32>
    %c48 = arith.constant 48 : index
    %c0_2 = arith.constant 0 : index
    %2 = vector.load %arg1[%c48, %c0_2] : memref<88x256xf32, #tpu.memory_space<vmem>>, vector<8x256xf32>
    %cst = arith.constant 1.000000e+00 : f32
    %3 = vector.broadcast %cst : f32 to vector<8x256xf32>
    %4 = arith.cmpf oeq, %2, %3 : vector<8x256xf32>
    %cst_3 = arith.constant 0.000000e+00 : f32
    %5 = vector.broadcast %cst_3 : f32 to vector<8x256xf32>
    %6 = arith.cmpf oeq, %2, %5 : vector<8x256xf32>
    %7 = arith.ori %6, %4 : vector<8x256xi1>
    %8 = arith.subf %0, %1 : vector<8x256xf32>
    %9 = arith.subf %1, %0 : vector<8x256xf32>
    %10 = arith.select %4, %8, %9 : vector<8x256xi1>, vector<8x256xf32>
    %cst_4 = arith.constant 0.000000e+00 : f32
    %11 = vector.broadcast %cst_4 : f32 to vector<8x256xf32>
    %12 = arith.maximumf %10, %11 : vector<8x256xf32>
    %13 = math.absf %10 : vector<8x256xf32>
    %cst_5 = arith.constant 0.000000e+00 : f32
    %14 = vector.broadcast %cst_5 : f32 to vector<8x256xf32>
    %15 = arith.subf %14, %13 : vector<8x256xf32>
    %16 = math.exp %15 : vector<8x256xf32>
    %17 = math.log1p %16 : vector<8x256xf32>
    %18 = arith.addf %12, %17 : vector<8x256xf32>
    %cst_6 = arith.constant 0.000000e+00 : f32
    %19 = vector.broadcast %cst_6 : f32 to vector<8x256xf32>
    %20 = arith.select %7, %18, %19 : vector<8x256xi1>, vector<8x256xf32>
    %21 = vector.shape_cast %20 : vector<8x256xf32> to vector<1x8x256xf32>
    %cst_7 = arith.constant dense<0.000000e+00> : vector<1xf32>
    %22 = vector.multi_reduction <add>, %21, %cst_7 [1, 2] : vector<1x8x256xf32> to vector<1xf32>
    %23 = vector.shape_cast %22 : vector<1xf32> to vector<1x1x1xf32>
    %24 = vector.extract %23[0, 0, 0] : f32 from vector<1x1x1xf32>
    %cst_8 = arith.constant 0.000000e+00 : f32
    %25 = vector.broadcast %cst_8 : f32 to vector<8x256xf32>
    %c16 = arith.constant 16 : index
    %c0_9 = arith.constant 0 : index
    %26 = vector.load %arg1[%c16, %c0_9] : memref<88x256xf32, #tpu.memory_space<vmem>>, vector<8x256xf32>
    %c56 = arith.constant 56 : index
    %c0_10 = arith.constant 0 : index
    %27 = vector.load %arg1[%c56, %c0_10] : memref<88x256xf32, #tpu.memory_space<vmem>>, vector<8x256xf32>
    %28 = arith.subf %26, %27 : vector<8x256xf32>
    %29 = math.absf %28 : vector<8x256xf32>
    %cst_11 = arith.constant 1.000000e+00 : f32
    %30 = vector.broadcast %cst_11 : f32 to vector<8x256xf32>
    %31 = arith.cmpf olt, %29, %30 : vector<8x256xf32>
    %cst_12 = arith.constant 5.000000e-01 : f32
    %32 = vector.broadcast %cst_12 : f32 to vector<8x256xf32>
    %33 = arith.mulf %32, %28 : vector<8x256xf32>
    %34 = arith.mulf %33, %28 : vector<8x256xf32>
    %cst_13 = arith.constant 5.000000e-01 : f32
    %35 = vector.broadcast %cst_13 : f32 to vector<8x256xf32>
    %36 = arith.subf %29, %35 : vector<8x256xf32>
    %37 = arith.select %31, %34, %36 : vector<8x256xi1>, vector<8x256xf32>
    %38 = arith.addf %25, %37 : vector<8x256xf32>
    %c24 = arith.constant 24 : index
    %c0_14 = arith.constant 0 : index
    %39 = vector.load %arg1[%c24, %c0_14] : memref<88x256xf32, #tpu.memory_space<vmem>>, vector<8x256xf32>
    %c64 = arith.constant 64 : index
    %c0_15 = arith.constant 0 : index
    %40 = vector.load %arg1[%c64, %c0_15] : memref<88x256xf32, #tpu.memory_space<vmem>>, vector<8x256xf32>
    %41 = arith.subf %39, %40 : vector<8x256xf32>
    %42 = math.absf %41 : vector<8x256xf32>
    %cst_16 = arith.constant 1.000000e+00 : f32
    %43 = vector.broadcast %cst_16 : f32 to vector<8x256xf32>
    %44 = arith.cmpf olt, %42, %43 : vector<8x256xf32>
    %cst_17 = arith.constant 5.000000e-01 : f32
    %45 = vector.broadcast %cst_17 : f32 to vector<8x256xf32>
    %46 = arith.mulf %45, %41 : vector<8x256xf32>
    %47 = arith.mulf %46, %41 : vector<8x256xf32>
    %cst_18 = arith.constant 5.000000e-01 : f32
    %48 = vector.broadcast %cst_18 : f32 to vector<8x256xf32>
    %49 = arith.subf %42, %48 : vector<8x256xf32>
    %50 = arith.select %44, %47, %49 : vector<8x256xi1>, vector<8x256xf32>
    %51 = arith.addf %38, %50 : vector<8x256xf32>
    %c32 = arith.constant 32 : index
    %c0_19 = arith.constant 0 : index
    %52 = vector.load %arg1[%c32, %c0_19] : memref<88x256xf32, #tpu.memory_space<vmem>>, vector<8x256xf32>
    %c72 = arith.constant 72 : index
    %c0_20 = arith.constant 0 : index
    %53 = vector.load %arg1[%c72, %c0_20] : memref<88x256xf32, #tpu.memory_space<vmem>>, vector<8x256xf32>
    %54 = arith.subf %52, %53 : vector<8x256xf32>
    %55 = math.absf %54 : vector<8x256xf32>
    %cst_21 = arith.constant 1.000000e+00 : f32
    %56 = vector.broadcast %cst_21 : f32 to vector<8x256xf32>
    %57 = arith.cmpf olt, %55, %56 : vector<8x256xf32>
    %cst_22 = arith.constant 5.000000e-01 : f32
    %58 = vector.broadcast %cst_22 : f32 to vector<8x256xf32>
    %59 = arith.mulf %58, %54 : vector<8x256xf32>
    %60 = arith.mulf %59, %54 : vector<8x256xf32>
    %cst_23 = arith.constant 5.000000e-01 : f32
    %61 = vector.broadcast %cst_23 : f32 to vector<8x256xf32>
    %62 = arith.subf %55, %61 : vector<8x256xf32>
    %63 = arith.select %57, %60, %62 : vector<8x256xi1>, vector<8x256xf32>
    %64 = arith.addf %51, %63 : vector<8x256xf32>
    %c40 = arith.constant 40 : index
    %c0_24 = arith.constant 0 : index
    %65 = vector.load %arg1[%c40, %c0_24] : memref<88x256xf32, #tpu.memory_space<vmem>>, vector<8x256xf32>
    %c80 = arith.constant 80 : index
    %c0_25 = arith.constant 0 : index
    %66 = vector.load %arg1[%c80, %c0_25] : memref<88x256xf32, #tpu.memory_space<vmem>>, vector<8x256xf32>
    %67 = arith.subf %65, %66 : vector<8x256xf32>
    %68 = math.absf %67 : vector<8x256xf32>
    %cst_26 = arith.constant 1.000000e+00 : f32
    %69 = vector.broadcast %cst_26 : f32 to vector<8x256xf32>
    %70 = arith.cmpf olt, %68, %69 : vector<8x256xf32>
    %cst_27 = arith.constant 5.000000e-01 : f32
    %71 = vector.broadcast %cst_27 : f32 to vector<8x256xf32>
    %72 = arith.mulf %71, %67 : vector<8x256xf32>
    %73 = arith.mulf %72, %67 : vector<8x256xf32>
    %cst_28 = arith.constant 5.000000e-01 : f32
    %74 = vector.broadcast %cst_28 : f32 to vector<8x256xf32>
    %75 = arith.subf %68, %74 : vector<8x256xf32>
    %76 = arith.select %70, %73, %75 : vector<8x256xi1>, vector<8x256xf32>
    %77 = arith.addf %64, %76 : vector<8x256xf32>
    %cst_29 = arith.constant 0.000000e+00 : f32
    %78 = vector.broadcast %cst_29 : f32 to vector<8x256xf32>
    %79 = arith.select %4, %77, %78 : vector<8x256xi1>, vector<8x256xf32>
    %80 = vector.shape_cast %79 : vector<8x256xf32> to vector<1x8x256xf32>
    %cst_30 = arith.constant dense<0.000000e+00> : vector<1xf32>
    %81 = vector.multi_reduction <add>, %80, %cst_30 [1, 2] : vector<1x8x256xf32> to vector<1xf32>
    %82 = vector.shape_cast %81 : vector<1xf32> to vector<1x1x1xf32>
    %83 = vector.extract %82[0, 0, 0] : f32 from vector<1x1x1xf32>
    %84 = tpu.iota {dimensions = array<i32: 1>} : vector<1x8x128xi32>
    %c0_i32 = arith.constant 0 : i32
    %85 = vector.broadcast %c0_i32 : i32 to vector<1x8x128xi32>
    %86 = arith.cmpi eq, %84, %85 : vector<1x8x128xi32>
    %cst_31 = arith.constant 0.000000e+00 : f32
    %87 = vector.broadcast %24 : f32 to vector<1x8x128xf32>
    %88 = vector.broadcast %cst_31 : f32 to vector<1x8x128xf32>
    %89 = arith.select %86, %87, %88 : vector<1x8x128xi1>, vector<1x8x128xf32>
    %c1_i32 = arith.constant 1 : i32
    %90 = vector.broadcast %c1_i32 : i32 to vector<1x8x128xi32>
    %91 = arith.cmpi eq, %84, %90 : vector<1x8x128xi32>
    %cst_32 = arith.constant 0.000000e+00 : f32
    %92 = vector.broadcast %83 : f32 to vector<1x8x128xf32>
    %93 = vector.broadcast %cst_32 : f32 to vector<1x8x128xf32>
    %94 = arith.select %91, %92, %93 : vector<1x8x128xi1>, vector<1x8x128xf32>
    %95 = arith.addf %89, %94 : vector<1x8x128xf32>
    %c0_33 = arith.constant 0 : index
    %c0_34 = arith.constant 0 : index
    %c0_35 = arith.constant 0 : index
    %96 = vector.load %arg2[%c0_33, %c0_34, %c0_35] : memref<1x8x128xf32, #tpu.memory_space<vmem>>, vector<1x8x128xf32>
    tpu.vector_store %arg2[%c0_33, %c0_34, %c0_35], %95 {strides = array<i32>} : memref<1x8x128xf32, #tpu.memory_space<vmem>>, vector<1x8x128xf32>,
    return
  }
  func.func @transform_0(%arg0: i32) -> (i32, i32) {
    %c0_i32 = arith.constant 0 : i32
    %c0_i32_0 = arith.constant 0 : i32
    return %c0_i32, %arg0 : i32, i32
  }
  func.func @transform_1(%arg0: i32) -> (i32, i32, i32) {
    %c0_i32 = arith.constant 0 : i32
    %c0_i32_0 = arith.constant 0 : i32
    %c0_i32_1 = arith.constant 0 : i32
    return %arg0, %c0_i32, %c0_i32_0 : i32, i32, i32
  }
}

</mosaic_0001>

<llo_original>
// kernel: tpu_custom_call.1
$region0: #{tpu_custom_call.1}
  #allocation0 [shape = 'u32[]', space=smem, size = 0x4, offset = 0x4, fixed_abs, tag = 'smem constant byte address 0x4 - core index']
  #allocation1 [shape = 'u32[72,128]{1,0:T(1,128)}', space=vmem, size = 0x9000, scoped, tag = 'internal scratch']
  %s0 = inlined_call_operand.hbm [shape: f32[88,256], index: 0, kind: input, shape index: {}]
  %s1 = inlined_call_operand.hbm [shape: f32[1,8,128], index: 1, kind: output, shape index: {}]
  %s2 = sld [smem:[#allocation0]]
  $region18: #{tpu_custom_call.1} parent=0
    _
  %s4 = ssub.s32 1, %s2
  %s5 = scalar_select 0, %s4, %s2
  $region1: #{tpu_custom_call.1} parent=0
    #allocation2 [shape = 'u8[90112]{0}', space=vmem, size = 0x16000, scoped, tag = 'input window, operand 0, single buffered']
    #allocation3 [shape = 's32[1]{0}', space=sflag, size = 0x4, scoped, tag = 'scoped memory for tpu_custom_call.1']
    #allocation4 [shape = 's32[1]{0}', space=sflag, size = 0x4, scoped, tag = 'scoped memory for tpu_custom_call.1']
    #allocation5 [shape = 'u8[4096]{0}', space=vmem, size = 0x1000, scoped, tag = 'output window, operand 0, single buffered']
    %6 = vsyncpa [#allocation3], 0
    %7 = vsyncpa [#allocation4], 0
    // Predicated region
    $region2: #{tpu_custom_call.1} parent=1 // pred_check
      _
    $region3: #{tpu_custom_call.1} parent=1 // pred_check_branch
      %9 = sbr.rel (0) target = $region5
    $region4: #{tpu_custom_call.1} parent=1 // pred_region
      %11 = vsyncadd [#allocation3], 0
      %s12 = sshll.u32 %s0, 4
      %s13 = int_to_ptr.hbm [resolvable:$true] %s12
      %s14 = sshll.u32 [#allocation2], 4
      %s15 = int_to_ptr.vmem [resolvable:$true] %s14
      %20 = dma.hbm_to_vmem [thread:$0]  %s13, 2816, %s15, [#allocation3], 256, 256, 16
    $region5: #{tpu_custom_call.1} parent=1 // pred_fallthru
      _
    // Predicated region
    $region6: #{tpu_custom_call.1} parent=1 // pred_check
      _
    $region7: #{tpu_custom_call.1} parent=1 // pred_check_branch
      %22 = sbr.rel (0) target = $region9
    $region8: #{tpu_custom_call.1} parent=1 // pred_region
      %24 = dma.done [#allocation3], 2816
    $region9: #{tpu_custom_call.1} parent=1 // pred_fallthru
      _
    %v25 = vld [vmem:[#allocation2] sm:$0xff]
    %v26 = vld [vmem:[#allocation2 + $0x8] sm:$0xff]
    %v27 = vld [vmem:[#allocation2 + $0x10] sm:$0xff]
    %v28 = vld [vmem:[#allocation2 + $0x18] sm:$0xff]
    %v29 = vld [vmem:[#allocation2 + $0x60] sm:$0xff]
    %v30 = vld [vmem:[#allocation2 + $0x68] sm:$0xff]
    %vm31 = vcmp.eq.f32.partialorder %v29, 1.0
    %vm32 = vcmp.eq.f32.partialorder %v30, 1.0
    %vm33 = vcmp.eq.f32.partialorder %v29, 0.0
    %vm34 = vcmp.eq.f32.partialorder %v30, 0.0
    %vm35 = vmor %vm33, %vm31
    %vm36 = vmor %vm34, %vm32
    %v37 = vsub.f32 %v25, %v27
    %v38 = vsub.f32 %v26, %v28
    %v39 = vsub.f32 %v27, %v25
    %v40 = vsub.f32 %v28, %v26
    %v41 = vsel %vm31, %v37, %v39
    %v42 = vsel %vm32, %v38, %v40
    %v43 = vmax.f32 %v41, 0.0
    %v44 = vmax.f32 %v42, 0.0
    %v45 = vand.u32 2147483647, %v41
    %v46 = vand.u32 2147483647, %v42
    %v47 = vsub.f32 0.0, %v45
    %v48 = vsub.f32 0.0, %v46
    %v49 = vmul.f32 %v47, 1.442695
    %v50 = vpow.pop %v49
    %v51 = vmul.f32 %v48, 1.442695
    %v52 = vpow.pop %v51
    %v53 = vadd.f32 %v50, 1.0
    %v54 = vlog2.pop %v53
    %v55 = vmul.f32 %v54, 0.6931472
    %v56 = vmul.f32 -0.5, %v50
    %v57 = vadd.f32 %v56, 1.0
    %v58 = vmul.f32 %v57, %v50
    %v59 = vand.u32 2147483647, %v50
    %vm60 = vcmp.lt.f32.partialorder %v59, 0.0004427343
    %v61 = vsel %vm60, %v58, %v55
    %v62 = vadd.f32 %v52, 1.0
    %v63 = vlog2.pop %v62
    %v64 = vmul.f32 %v63, 0.6931472
    %v65 = vmul.f32 -0.5, %v52
    %v66 = vadd.f32 %v65, 1.0
    %v67 = vmul.f32 %v66, %v52
    %v68 = vand.u32 2147483647, %v52
    %vm69 = vcmp.lt.f32.partialorder %v68, 0.0004427343
    %v70 = vsel %vm69, %v67, %v64
    %v71 = vadd.f32 %v43, %v61
    %v72 = vadd.f32 %v44, %v70
    %v73 = vsel %vm35, %v71, 0.0
    %v74 = vsel %vm36, %v72, 0.0
    %v75 = vadd.f32 %v73, %v74
    %76 = vadd.xlane.f32.xlu0 %v75
    %v77 = vpop.xlane.xlu0 %76
    %v78 = vrot.slane %v77, 4
    %v79 = vadd.f32 %v77, %v78
    %v80 = vrot.slane %v79, 2
    %v81 = vadd.f32 %v79, %v80
    %v82 = vrot.slane %v81, 1
    %v83 = vadd.f32 %v81, %v82
    %s84 = vtos %v83
    %v85 = vld [vmem:[#allocation2 + $0x20] sm:$0xff]
    %v86 = vld [vmem:[#allocation2 + $0x28] sm:$0xff]
    %v87 = vld [vmem:[#allocation2 + $0x70] sm:$0xff]
    %v88 = vld [vmem:[#allocation2 + $0x78] sm:$0xff]
    %v89 = vsub.f32 %v85, %v87
    %v90 = vsub.f32 %v86, %v88
    %v91 = vand.u32 2147483647, %v89
    %v92 = vand.u32 2147483647, %v90
    %vm93 = vcmp.lt.f32.partialorder %v91, 1.0
    %vm94 = vcmp.lt.f32.partialorder %v92, 1.0
    %v95 = vmul.f32 %v89, 0.5
    %v96 = vmul.f32 %v90, 0.5
    %v97 = vmul.f32 %v95, %v89
    %v98 = vmul.f32 %v96, %v90
    %v99 = vsub.f32 %v91, 0.5
    %v100 = vsub.f32 %v92, 0.5
    %v101 = vsel %vm93, %v97, %v99
    %v102 = vsel %vm94, %v98, %v100
    %v103 = vadd.f32 %v101, 0.0
    %v104 = vadd.f32 %v102, 0.0
    %v105 = vld [vmem:[#allocation2 + $0x30] sm:$0xff]
    %v106 = vld [vmem:[#allocation2 + $0x38] sm:$0xff]
    %v107 = vld [vmem:[#allocation2 + $0x80] sm:$0xff]
    %v108 = vld [vmem:[#allocation2 + $0x88] sm:$0xff]
    %v109 = vsub.f32 %v105, %v107
    %v110 = vsub.f32 %v106, %v108
    %v111 = vand.u32 2147483647, %v109
    %v112 = vand.u32 2147483647, %v110
    %vm113 = vcmp.lt.f32.partialorder %v111, 1.0
    %vm114 = vcmp.lt.f32.partialorder %v112, 1.0
    %v115 = vmul.f32 %v109, 0.5
    %v116 = vmul.f32 %v110, 0.5
    %v117 = vmul.f32 %v115, %v109
    %v118 = vmul.f32 %v116, %v110
    %v119 = vsub.f32 %v111, 0.5
    %v120 = vsub.f32 %v112, 0.5
    %v121 = vsel %vm113, %v117, %v119
    %v122 = vsel %vm114, %v118, %v120
    %v123 = vadd.f32 %v103, %v121
    %v124 = vadd.f32 %v104, %v122
    %v125 = vld [vmem:[#allocation2 + $0x40] sm:$0xff]
    %v126 = vld [vmem:[#allocation2 + $0x48] sm:$0xff]
    %v127 = vld [vmem:[#allocation2 + $0x90] sm:$0xff]
    %v128 = vld [vmem:[#allocation2 + $0x98] sm:$0xff]
    %v129 = vsub.f32 %v125, %v127
    %v130 = vsub.f32 %v126, %v128
    %v131 = vand.u32 2147483647, %v129
    %v132 = vand.u32 2147483647, %v130
    %vm133 = vcmp.lt.f32.partialorder %v131, 1.0
    %vm134 = vcmp.lt.f32.partialorder %v132, 1.0
    %v135 = vmul.f32 %v129, 0.5
    %v136 = vmul.f32 %v130, 0.5
    %v137 = vmul.f32 %v135, %v129
    %v138 = vmul.f32 %v136, %v130
    %v139 = vsub.f32 %v131, 0.5
    %v140 = vsub.f32 %v132, 0.5
    %v141 = vsel %vm133, %v137, %v139
    %v142 = vsel %vm134, %v138, %v140
    %v143 = vadd.f32 %v123, %v141
    %v144 = vadd.f32 %v124, %v142
    %v145 = vld [vmem:[#allocation2 + $0x50] sm:$0xff]
    %v146 = vld [vmem:[#allocation2 + $0x58] sm:$0xff]
    %v147 = vld [vmem:[#allocation2 + $0xa0] sm:$0xff]
    %v148 = vld [vmem:[#allocation2 + $0xa8] sm:$0xff]
    %v149 = vsub.f32 %v145, %v147
    %v150 = vsub.f32 %v146, %v148
    %v151 = vand.u32 2147483647, %v149
    %v152 = vand.u32 2147483647, %v150
    %vm153 = vcmp.lt.f32.partialorder %v151, 1.0
    %vm154 = vcmp.lt.f32.partialorder %v152, 1.0
    %v155 = vmul.f32 %v149, 0.5
    %v156 = vmul.f32 %v150, 0.5
    %v157 = vmul.f32 %v155, %v149
    %v158 = vmul.f32 %v156, %v150
    %v159 = vsub.f32 %v151, 0.5
    %v160 = vsub.f32 %v152, 0.5
    %v161 = vsel %vm153, %v157, %v159
    %v162 = vsel %vm154, %v158, %v160
    %v163 = vadd.f32 %v143, %v161
    %v164 = vadd.f32 %v144, %v162
    %v165 = vsel %vm31, %v163, 0.0
    %v166 = vsel %vm32, %v164, 0.0
    %v167 = vadd.f32 %v165, %v166
    %168 = vadd.xlane.f32.xlu0 %v167
    %v169 = vpop.xlane.xlu0 %168
    %v170 = vrot.slane %v169, 4
    %v171 = vadd.f32 %v169, %v170
    %v172 = vrot.slane %v171, 2
    %v173 = vadd.f32 %v171, %v172
    %v174 = vrot.slane %v173, 1
    %v175 = vadd.f32 %v173, %v174
    %s176 = vtos %v175
    %v177 = vlaneseq
    %v178 = vshrl.u32 %v177, 7
    %vm179 = vcmp.eq.s32.totalorder %v178, 0
    %v180 = vstv %s84
    %v181 = vsel %vm179, %v180, 0.0
    %vm182 = vcmp.eq.s32.totalorder %v178, 1
    %v183 = vstv %s176
    %v184 = vsel %vm182, %v183, 0.0
    %v185 = vadd.f32 %v181, %v184
    %186 = vst [vmem:[#allocation5] sm:$0xff] %v185
    // Predicated region
    $region10: #{tpu_custom_call.1} parent=1 // pred_check
      _
    $region11: #{tpu_custom_call.1} parent=1 // pred_check_branch
      %188 = sbr.rel (0) target = $region13
    $region12: #{tpu_custom_call.1} parent=1 // pred_region
      %190 = vsyncadd [#allocation4], 0
      %s192 = sshll.u32 [#allocation5], 4
      %s193 = int_to_ptr.vmem [resolvable:$true] %s192
      %s194 = sshll.u32 %s1, 4
      %s195 = int_to_ptr.hbm [resolvable:$true] %s194
      %197 = dma.vmem_to_hbm [thread:$0]  %s193, 128, %s195, [#allocation4]
    $region13: #{tpu_custom_call.1} parent=1 // pred_fallthru
      _
    // Predicated region
    $region14: #{tpu_custom_call.1} parent=1 // pred_check
      _
    $region15: #{tpu_custom_call.1} parent=1 // pred_check_branch
      %199 = sbr.rel (0) target = $region17
    $region16: #{tpu_custom_call.1} parent=1 // pred_region
      %201 = dma.done [#allocation4], 128
    $region17: #{tpu_custom_call.1} parent=1 // pred_fallthru
      _
    %202 = vsyncpa [#allocation3], 1
    %203 = vsyncpa [#allocation4], 1

</llo_original>
